<compile_context>
chip_gen: v5e
topology: v5e:2x2
jax: 0.10.0
libtpu: 0.0.40
codegen_flags: <defaults>
</compile_context>

<pallas_src>
import jax
import jax.numpy as jnp
from jax.experimental import pallas as pl
from jax.experimental.pallas import tpu as pltpu

HIDDEN_DIM = 128
NEG_SLOPE = 0.01  # PyTorch LeakyReLU default
TILE_M = 1024     # rows per grid step (~0.25 MiB/buffer at input_dim=32 f32)


def _make_kernel(n_inputs):
    """Kernel over refs: [x_0..x_{n-1}, w1_0..w1_{n-1}, b1, w2, b2, out]."""

    def kernel(*refs):
        x_refs = refs[:n_inputs]
        w1_refs = refs[n_inputs:2 * n_inputs]
        b1_ref, w2_ref, b2_ref, o_ref = refs[2 * n_inputs:]

        # First linear. The concat is fused: per-input-chunk matmuls accumulated
        # in f32 on the MXU.
        h = jnp.dot(x_refs[0][...], w1_refs[0][...],
                    preferred_element_type=jnp.float32)
        for x_ref, w1_ref in zip(x_refs[1:], w1_refs[1:]):
            h = h + jnp.dot(x_ref[...], w1_ref[...],
                            preferred_element_type=jnp.float32)
        h = h + b1_ref[...].astype(jnp.float32)

        # LeakyReLU on the f32 accumulator (VPU f32 path works on all chips).
        h = jnp.where(h > 0, h, NEG_SLOPE * h)

        # Second linear (cast only at the MXU input, keep f32 accumulation).
        out = jnp.dot(h.astype(w2_ref.dtype), w2_ref[...],
                      preferred_element_type=jnp.float32)
        out = out + b2_ref[...].astype(jnp.float32)
        o_ref[...] = out.astype(o_ref.dtype)

    return kernel


def cvae_decoder_forward(inputs, params, *, compute_dtype=None):
    """Forward pass of cVAEDecoder.

    inputs: list/tuple of arrays, each shaped (..., d_i) with identical leading
            dims; semantics match torch.cat(inputs, dim=-1) -> mlp(net).
    params: dict with w1 (input_dim, 128), b1 (1, 128),
                      w2 (128, output_dim), b2 (1, output_dim).
    compute_dtype: optionally jnp.bfloat16 to halve HBM bytes on v6e/v7x.
    """
    inputs = list(inputs)
    lead_shape = inputs[0].shape[:-1]
    n_rows = 1
    for s in lead_shape:
        n_rows *= s

    w1, b1, w2, b2 = params["w1"], params["b1"], params["w2"], params["b2"]
    output_dim = w2.shape[-1]
    out_dtype = inputs[0].dtype

    # Flatten leading dims -> (n_rows, d_i); optional bf16 compression.
    xs, dims = [], []
    for x in inputs:
        d = x.shape[-1]
        dims.append(d)
        x2 = x.reshape(n_rows, d)
        if compute_dtype is not None:
            x2 = x2.astype(compute_dtype)
        xs.append(x2)

    # Split w1 into per-input chunks (fuses the concat into the kernel).
    w1_chunks, off = [], 0
    for d in dims:
        w = w1[off:off + d]
        off += d
        if compute_dtype is not None:
            w = w.astype(compute_dtype)
        w1_chunks.append(w)
    w2c = w2.astype(compute_dtype) if compute_dtype is not None else w2
    # Biases stay f32 (added to the f32 accumulator).
    b1f = b1.astype(jnp.float32)
    b2f = b2.astype(jnp.float32)

    # Row tiling: large tiles when possible, full-extent block for tiny batches.
    tile_m = TILE_M if n_rows >= TILE_M else n_rows
    grid = (pl.cdiv(n_rows, tile_m),)

    x_specs = [pl.BlockSpec((tile_m, d), lambda i: (i, 0)) for d in dims]
    const2 = lambda i: (0, 0)  # weights/biases resident across all grid steps
    w_specs = [pl.BlockSpec(w.shape, const2) for w in w1_chunks]
    misc_specs = [
        pl.BlockSpec(b1f.shape, const2),
        pl.BlockSpec(w2c.shape, const2),
        pl.BlockSpec(b2f.shape, const2),
    ]

    out2d = pl.pallas_call(
        _make_kernel(len(xs)),
        out_shape=jax.ShapeDtypeStruct((n_rows, output_dim), out_dtype),
        grid=grid,
        in_specs=x_specs + w_specs + misc_specs,
        out_specs=pl.BlockSpec((tile_m, output_dim), lambda i: (i, 0)),
        compiler_params=pltpu.CompilerParams(
            dimension_semantics=("parallel",)),
    )(*xs, *w1_chunks, b1f, w2c, b2f)

    return out2d.reshape(*lead_shape, output_dim)


def init_params(key, input_dim, output_dim=6, dtype=jnp.float32):
    """Deterministic synthetic init (PyTorch-style uniform bounds)."""
    k1, k2, k3, k4 = jax.random.split(key, 4)
    bound1 = 1.0 / (input_dim ** 0.5)
    bound2 = 1.0 / (HIDDEN_DIM ** 0.5)
    return {
        "w1": jax.random.uniform(k1, (input_dim, HIDDEN_DIM), dtype, -bound1, bound1),
        "b1": jax.random.uniform(k2, (1, HIDDEN_DIM), dtype, -bound1, bound1),
        "w2": jax.random.uniform(k3, (HIDDEN_DIM, output_dim), dtype, -bound2, bound2),
        "b2": jax.random.uniform(k4, (1, output_dim), dtype, -bound2, bound2),
    }


def _reference(inputs, params):
    net = jnp.concatenate(inputs, axis=-1)
    h = net @ params["w1"] + params["b1"][0]
    h = jnp.where(h > 0, h, NEG_SLOPE * h)
    return h @ params["w2"] + params["b2"][0]


if __name__ == "__main__":
    key = jax.random.PRNGKey(0)
    k_in1, k_in2, k_big1, k_big2, k_p = jax.random.split(key, 5)

    # Two conditioning inputs (latent z and condition c) as the module's
    # forward expects a list of tensors concatenated on the last dim.
    input_dim = 32   # 16 + 16
    output_dim = 6
    params = init_params(k_p, input_dim, output_dim)

    # Small case (single full-extent block).
    batch = 8
    z = jax.random.normal(k_in1, (batch, 16), dtype=jnp.float32)
    c = jax.random.normal(k_in2, (batch, 16), dtype=jnp.float32)
    out = jax.block_until_ready(cvae_decoder_forward([z, c], params))
    ref = _reference([z, c], params)
    assert out.shape == (batch, output_dim)
    assert jnp.allclose(out, ref, atol=1e-5, rtol=1e-5)

    # Medium case exercising the tiled/pipelined path (multi-step grid with a
    # ragged last block).
    big = 2053
    zb = jax.random.normal(k_big1, (big, 16), dtype=jnp.float32)
    cb = jax.random.normal(k_big2, (big, 16), dtype=jnp.float32)
    out_b = jax.block_until_ready(cvae_decoder_forward([zb, cb], params))
    ref_b = _reference([zb, cb], params)
    assert out_b.shape == (big, output_dim)
    assert jnp.allclose(out_b, ref_b, atol=1e-4, rtol=1e-4)

    print("KERNEL_OK")
</pallas_src>

<mosaic_0001>
module attributes {stable_mosaic.version = 11 : i64} {
  func.func @kernel(%arg0: i32, %arg1: memref<8x16xf32, #tpu.memory_space<vmem>>, %arg2: memref<8x16xf32, #tpu.memory_space<vmem>>, %arg3: memref<16x128xf32, #tpu.memory_space<vmem>>, %arg4: memref<16x128xf32, #tpu.memory_space<vmem>>, %arg5: memref<1x128xf32, #tpu.memory_space<vmem>>, %arg6: memref<128x6xf32, #tpu.memory_space<vmem>>, %arg7: memref<1x6xf32, #tpu.memory_space<vmem>>, %arg8: memref<8x6xf32, #tpu.memory_space<vmem>>) attributes {dimension_semantics = [#tpu.dimension_semantics<parallel>], iteration_bounds = array<i64: 1>, scalar_prefetch = 0 : i64, scratch_operands = 0 : i64, tpu.core_type = #tpu.core_type<tc>, window_params = [{transform_indices = @transform_0, window_bounds = array<i64: 8, 16>}, {transform_indices = @transform_1, window_bounds = array<i64: 8, 16>}, {pipeline_mode = #tpu.pipeline_mode<synchronous>, transform_indices = @transform_2, window_bounds = array<i64: 16, 128>}, {pipeline_mode = #tpu.pipeline_mode<synchronous>, transform_indices = @transform_3, window_bounds = array<i64: 16, 128>}, {pipeline_mode = #tpu.pipeline_mode<synchronous>, transform_indices = @transform_4, window_bounds = array<i64: 1, 128>}, {pipeline_mode = #tpu.pipeline_mode<synchronous>, transform_indices = @transform_5, window_bounds = array<i64: 128, 6>}, {pipeline_mode = #tpu.pipeline_mode<synchronous>, transform_indices = @transform_6, window_bounds = array<i64: 1, 6>}, {transform_indices = @transform_7, window_bounds = array<i64: 8, 6>}]} {
    %c0 = arith.constant 0 : index
    %c0_0 = arith.constant 0 : index
    %0 = vector.load %arg1[%c0, %c0_0] : memref<8x16xf32, #tpu.memory_space<vmem>>, vector<8x16xf32>
    %c0_1 = arith.constant 0 : index
    %c0_2 = arith.constant 0 : index
    %1 = vector.load %arg3[%c0_1, %c0_2] : memref<16x128xf32, #tpu.memory_space<vmem>>, vector<16x128xf32>
    %cst = arith.constant dense<0.000000e+00> : vector<8x128xf32>
    %2 = tpu.matmul %0, %1, %cst {dimension_numbers = #tpu.dot_dimension_numbers<[1], [0], [0], [1], [0, 0, 1, 1], [], []>} : vector<8x16xf32>, vector<16x128xf32>, vector<8x128xf32> -> vector<8x128xf32>
    %c0_3 = arith.constant 0 : index
    %c0_4 = arith.constant 0 : index
    %3 = vector.load %arg2[%c0_3, %c0_4] : memref<8x16xf32, #tpu.memory_space<vmem>>, vector<8x16xf32>
    %c0_5 = arith.constant 0 : index
    %c0_6 = arith.constant 0 : index
    %4 = vector.load %arg4[%c0_5, %c0_6] : memref<16x128xf32, #tpu.memory_space<vmem>>, vector<16x128xf32>
    %cst_7 = arith.constant dense<0.000000e+00> : vector<8x128xf32>
    %5 = tpu.matmul %3, %4, %cst_7 {dimension_numbers = #tpu.dot_dimension_numbers<[1], [0], [0], [1], [0, 0, 1, 1], [], []>} : vector<8x16xf32>, vector<16x128xf32>, vector<8x128xf32> -> vector<8x128xf32>
    %6 = arith.addf %2, %5 : vector<8x128xf32>
    %c0_8 = arith.constant 0 : index
    %c0_9 = arith.constant 0 : index
    %7 = vector.load %arg5[%c0_8, %c0_9] : memref<1x128xf32, #tpu.memory_space<vmem>>, vector<1x128xf32>
    %8 = vector.broadcast %7 : vector<1x128xf32> to vector<8x128xf32>
    %9 = arith.addf %6, %8 : vector<8x128xf32>
    %cst_10 = arith.constant 0.000000e+00 : f32
    %10 = vector.broadcast %cst_10 : f32 to vector<8x128xf32>
    %11 = arith.cmpf ogt, %9, %10 : vector<8x128xf32>
    %cst_11 = arith.constant 0.00999999977 : f32
    %12 = vector.broadcast %cst_11 : f32 to vector<8x128xf32>
    %13 = arith.mulf %12, %9 : vector<8x128xf32>
    %14 = arith.select %11, %9, %13 : vector<8x128xi1>, vector<8x128xf32>
    %c0_12 = arith.constant 0 : index
    %c0_13 = arith.constant 0 : index
    %15 = vector.load %arg6[%c0_12, %c0_13] : memref<128x6xf32, #tpu.memory_space<vmem>>, vector<128x6xf32>
    %cst_14 = arith.constant dense<0.000000e+00> : vector<8x6xf32>
    %16 = tpu.matmul %14, %15, %cst_14 {dimension_numbers = #tpu.dot_dimension_numbers<[1], [0], [0], [1], [0, 0, 1, 1], [], []>} : vector<8x128xf32>, vector<128x6xf32>, vector<8x6xf32> -> vector<8x6xf32>
    %c0_15 = arith.constant 0 : index
    %c0_16 = arith.constant 0 : index
    %17 = vector.load %arg7[%c0_15, %c0_16] : memref<1x6xf32, #tpu.memory_space<vmem>>, vector<1x6xf32>
    %18 = vector.broadcast %17 : vector<1x6xf32> to vector<8x6xf32>
    %19 = arith.addf %16, %18 : vector<8x6xf32>
    %c0_17 = arith.constant 0 : index
    %c0_18 = arith.constant 0 : index
    %20 = vector.load %arg8[%c0_17, %c0_18] : memref<8x6xf32, #tpu.memory_space<vmem>>, vector<8x6xf32>
    tpu.vector_store %arg8[%c0_17, %c0_18], %19 {strides = array<i32>} : memref<8x6xf32, #tpu.memory_space<vmem>>, vector<8x6xf32>,
    return
  }
  func.func @transform_0(%arg0: i32) -> (i32, i32) {
    %c0_i32 = arith.constant 0 : i32
    %c0_i32_0 = arith.constant 0 : i32
    return %arg0, %c0_i32 : i32, i32
  }
  func.func @transform_1(%arg0: i32) -> (i32, i32) {
    %c0_i32 = arith.constant 0 : i32
    %c0_i32_0 = arith.constant 0 : i32
    return %arg0, %c0_i32 : i32, i32
  }
  func.func @transform_2(%arg0: i32) -> (i32, i32) {
    %c0_i32 = arith.constant 0 : i32
    %c0_i32_0 = arith.constant 0 : i32
    %c0_i32_1 = arith.constant 0 : i32
    return %c0_i32, %c0_i32_0 : i32, i32
  }
  func.func @transform_3(%arg0: i32) -> (i32, i32) {
    %c0_i32 = arith.constant 0 : i32
    %c0_i32_0 = arith.constant 0 : i32
    %c0_i32_1 = arith.constant 0 : i32
    return %c0_i32, %c0_i32_0 : i32, i32
  }
  func.func @transform_4(%arg0: i32) -> (i32, i32) {
    %c0_i32 = arith.constant 0 : i32
    %c0_i32_0 = arith.constant 0 : i32
    %c0_i32_1 = arith.constant 0 : i32
    return %c0_i32, %c0_i32_0 : i32, i32
  }
  func.func @transform_5(%arg0: i32) -> (i32, i32) {
    %c0_i32 = arith.constant 0 : i32
    %c0_i32_0 = arith.constant 0 : i32
    %c0_i32_1 = arith.constant 0 : i32
    return %c0_i32, %c0_i32_0 : i32, i32
  }
  func.func @transform_6(%arg0: i32) -> (i32, i32) {
    %c0_i32 = arith.constant 0 : i32
    %c0_i32_0 = arith.constant 0 : i32
    %c0_i32_1 = arith.constant 0 : i32
    return %c0_i32, %c0_i32_0 : i32, i32
  }
  func.func @transform_7(%arg0: i32) -> (i32, i32) {
    %c0_i32 = arith.constant 0 : i32
    %c0_i32_0 = arith.constant 0 : i32
    return %arg0, %c0_i32 : i32, i32
  }
}

</mosaic_0001>

<llo_original>
// kernel: tpu_custom_call.1
$region0: #{tpu_custom_call.1}
  #allocation0 [shape = 'u32[]', space=smem, size = 0x4, offset = 0x4, fixed_abs, tag = 'smem constant byte address 0x4 - core index']
  #allocation1 [shape = 'u32[72,128]{1,0:T(1,128)}', space=vmem, size = 0x9000, scoped, tag = 'internal scratch']
  %s0 = inlined_call_operand.vmem [shape: f32[8,16], index: 0, kind: input, shape index: {}]
  %s1 = inlined_call_operand.vmem [shape: f32[8,16], index: 1, kind: input, shape index: {}]
  %s2 = inlined_call_operand.vmem [shape: f32[16,128], index: 2, kind: input, shape index: {}]
  %s3 = inlined_call_operand.vmem [shape: f32[16,128], index: 3, kind: input, shape index: {}]
  %s4 = inlined_call_operand.vmem [shape: f32[1,128], index: 4, kind: input, shape index: {}]
  %s5 = inlined_call_operand.vmem [shape: f32[128,6], index: 5, kind: input, shape index: {}]
  %s6 = inlined_call_operand.vmem [shape: f32[1,6], index: 6, kind: input, shape index: {}]
  %s7 = inlined_call_operand.hbm [shape: f32[8,6], index: 7, kind: output, shape index: {}]
  %s8 = sld [smem:[#allocation0]]
  $region38: #{tpu_custom_call.1} parent=0
    _
  %s10 = ssub.s32 1, %s8
  %s11 = scalar_select 0, %s10, %s8
  $region1: #{tpu_custom_call.1} parent=0
    #allocation2 [shape = 'u8[4096]{0}', space=vmem, size = 0x1000, scoped, tag = 'output window, operand 0, single buffered']
    #allocation3 [shape = 's32[1]{0}', space=sflag, size = 0x4, scoped, tag = 'scoped memory for tpu_custom_call.1']
    %12 = vsyncpa [#allocation3], 0
    // Predicated region
    $region2: #{tpu_custom_call.1} parent=1 // pred_check
      _
    $region3: #{tpu_custom_call.1} parent=1 // pred_check_branch
      %14 = sbr.rel (0) target = $region5
    $region4: #{tpu_custom_call.1} parent=1 // pred_region
      _
    $region5: #{tpu_custom_call.1} parent=1 // pred_fallthru
      _
    // Predicated region
    $region6: #{tpu_custom_call.1} parent=1 // pred_check
      _
    $region7: #{tpu_custom_call.1} parent=1 // pred_check_branch
      %16 = sbr.rel (0) target = $region9
    $region8: #{tpu_custom_call.1} parent=1 // pred_region
      _
    $region9: #{tpu_custom_call.1} parent=1 // pred_fallthru
      _
    // Predicated region
    $region10: #{tpu_custom_call.1} parent=1 // pred_check
      _
    $region11: #{tpu_custom_call.1} parent=1 // pred_check_branch
      %18 = sbr.rel (0) target = $region13
    $region12: #{tpu_custom_call.1} parent=1 // pred_region
      _
    $region13: #{tpu_custom_call.1} parent=1 // pred_fallthru
      _
    // Predicated region
    $region14: #{tpu_custom_call.1} parent=1 // pred_check
      _
    $region15: #{tpu_custom_call.1} parent=1 // pred_check_branch
      %20 = sbr.rel (0) target = $region17
    $region16: #{tpu_custom_call.1} parent=1 // pred_region
      _
    $region17: #{tpu_custom_call.1} parent=1 // pred_fallthru
      _
    // Predicated region
    $region18: #{tpu_custom_call.1} parent=1 // pred_check
      _
    $region19: #{tpu_custom_call.1} parent=1 // pred_check_branch
      %22 = sbr.rel (0) target = $region21
    $region20: #{tpu_custom_call.1} parent=1 // pred_region
      _
    $region21: #{tpu_custom_call.1} parent=1 // pred_fallthru
      _
    // Predicated region
    $region22: #{tpu_custom_call.1} parent=1 // pred_check
      _
    $region23: #{tpu_custom_call.1} parent=1 // pred_check_branch
      %24 = sbr.rel (0) target = $region25
    $region24: #{tpu_custom_call.1} parent=1 // pred_region
      _
    $region25: #{tpu_custom_call.1} parent=1 // pred_fallthru
      _
    // Predicated region
    $region26: #{tpu_custom_call.1} parent=1 // pred_check
      _
    $region27: #{tpu_custom_call.1} parent=1 // pred_check_branch
      %26 = sbr.rel (0) target = $region29
    $region28: #{tpu_custom_call.1} parent=1 // pred_region
      _
    $region29: #{tpu_custom_call.1} parent=1 // pred_fallthru
      _
    %v27 = vld [vmem:[%s0] sm:$0xff]
    %v28 = vld [vmem:[%s2] sm:$0xff]
    %v29 = vld [vmem:[%s2 + $0x8] sm:$0xff]
    %v30 = vld [vmem:[%s1] sm:$0xff]
    %v31 = vld [vmem:[%s3] sm:$0xff]
    %v32 = vld [vmem:[%s3 + $0x8] sm:$0xff]
    %vm33 = vcmask 130048
    %v35 = vsel %vm33, %v30, 0
    %37 = vmatpush.msra.mxu0 0.0
    %38 = vmatpush.msra.mxu0 0.0
    %39 = vmatpush.msra.mxu0 0.0
    %40 = vmatpush.msra.mxu0 0.0
    %41 = vmatpush.msra.mxu0 0.0
    %42 = vmatpush.msra.mxu0 0.0
    %43 = vmatpush.msra.mxu0 0.0
    %44 = vmatpush.msra.mxu0 0.0
    %45 = vmatpush.msra.mxu0 0.0
    %46 = vmatpush.msra.mxu0 0.0
    %47 = vmatpush.msra.mxu0 0.0
    %48 = vmatpush.msra.mxu0 0.0
    %49 = vmatpush.msra.mxu0 0.0
    %50 = vmatpush.msra.mxu0 0.0
    %51 = vmatpush.msra.mxu0 %v32
    %52 = vmatpush.msra.mxu0 %v31
    %53 = vmatmul.f32.gmra.mxu0 %v35
    %v54 = vpop.f32.mrf.mxu0
    %v55 = vadd.f32 0.0, %v54
    %56 = vdwg.mxu0
    %v58 = vsel %vm33, %v27, 0
    %60 = vmatpush.msra.mxu0 0.0
    %61 = vmatpush.msra.mxu0 0.0
    %62 = vmatpush.msra.mxu0 0.0
    %63 = vmatpush.msra.mxu0 0.0
    %64 = vmatpush.msra.mxu0 0.0
    %65 = vmatpush.msra.mxu0 0.0
    %66 = vmatpush.msra.mxu0 0.0
    %67 = vmatpush.msra.mxu0 0.0
    %68 = vmatpush.msra.mxu0 0.0
    %69 = vmatpush.msra.mxu0 0.0
    %70 = vmatpush.msra.mxu0 0.0
    %71 = vmatpush.msra.mxu0 0.0
    %72 = vmatpush.msra.mxu0 0.0
    %73 = vmatpush.msra.mxu0 0.0
    %74 = vmatpush.msra.mxu0 %v29
    %75 = vmatpush.msra.mxu0 %v28
    %76 = vmatmul.f32.gmra.mxu0 %v58
    %v77 = vpop.f32.mrf.mxu0
    %v78 = vadd.f32 %v55, %v77
    %79 = vdwg.mxu0
    %v80 = vld [vmem:[%s4] sm:$0x1]
    %v82 = vperm.slane %v80, 0
    %v84 = vadd.f32 %v78, %v82
    %vm85 = vcmp.gt.f32.partialorder %v84, 0.0
    %v86 = vmul.f32 %v84, 0.01
    %v87 = vsel %vm85, %v84, %v86
    %v88 = vld [vmem:[%s5] sm:$0xff]
    %v89 = vld [vmem:[%s5 + $0x8] sm:$0xff]
    %v90 = vld [vmem:[%s5 + $0x10] sm:$0xff]
    %v91 = vld [vmem:[%s5 + $0x18] sm:$0xff]
    %v92 = vld [vmem:[%s5 + $0x20] sm:$0xff]
    %v93 = vld [vmem:[%s5 + $0x28] sm:$0xff]
    %v94 = vld [vmem:[%s5 + $0x30] sm:$0xff]
    %v95 = vld [vmem:[%s5 + $0x38] sm:$0xff]
    %v96 = vld [vmem:[%s5 + $0x40] sm:$0xff]
    %v97 = vld [vmem:[%s5 + $0x48] sm:$0xff]
    %v98 = vld [vmem:[%s5 + $0x50] sm:$0xff]
    %v99 = vld [vmem:[%s5 + $0x58] sm:$0xff]
    %v100 = vld [vmem:[%s5 + $0x60] sm:$0xff]
    %v101 = vld [vmem:[%s5 + $0x68] sm:$0xff]
    %v102 = vld [vmem:[%s5 + $0x70] sm:$0xff]
    %v103 = vld [vmem:[%s5 + $0x78] sm:$0xff]
    %v104 = vld [vmem:[%s6] sm:$0x1]
    %v106 = vperm.slane %v104, 0
    %108 = vmatpush.msra.mxu0 %v103
    %109 = vmatpush.msra.mxu0 %v102
    %110 = vmatpush.msra.mxu0 %v101
    %111 = vmatpush.msra.mxu0 %v100
    %112 = vmatpush.msra.mxu0 %v99
    %113 = vmatpush.msra.mxu0 %v98
    %114 = vmatpush.msra.mxu0 %v97
    %115 = vmatpush.msra.mxu0 %v96
    %116 = vmatpush.msra.mxu0 %v95
    %117 = vmatpush.msra.mxu0 %v94
    %118 = vmatpush.msra.mxu0 %v93
    %119 = vmatpush.msra.mxu0 %v92
    %120 = vmatpush.msra.mxu0 %v91
    %121 = vmatpush.msra.mxu0 %v90
    %122 = vmatpush.msra.mxu0 %v89
    %123 = vmatpush.msra.mxu0 %v88
    %124 = vmatmul.f32.gmra.mxu0 %v87
    %v125 = vpop.f32.mrf.mxu0
    %v126 = vadd.f32 %v106, %v125
    %127 = vdwg.mxu0
    %vm128 = vcmask 48128
    %129 = vst.msk [vmem:[#allocation2] sm:$0xff] %vm128, %v126
    // Predicated region
    $region30: #{tpu_custom_call.1} parent=1 // pred_check
      _
    $region31: #{tpu_custom_call.1} parent=1 // pred_check_branch
      %131 = sbr.rel (0) target = $region33
    $region32: #{tpu_custom_call.1} parent=1 // pred_region
      %133 = vsyncadd [#allocation3], 0
      %s135 = sshll.u32 [#allocation2], 4
      %s136 = int_to_ptr.vmem [resolvable:$true] %s135
      %s137 = sshll.u32 %s7, 4
      %s138 = int_to_ptr.hbm [resolvable:$true] %s137
      %140 = dma.vmem_to_hbm [thread:$0]  %s136, 128, %s138, [#allocation3]
    $region33: #{tpu_custom_call.1} parent=1 // pred_fallthru
      _
    // Predicated region
    $region34: #{tpu_custom_call.1} parent=1 // pred_check
      _
    $region35: #{tpu_custom_call.1} parent=1 // pred_check_branch
      %142 = sbr.rel (0) target = $region37
    $region36: #{tpu_custom_call.1} parent=1 // pred_region
      %144 = dma.done [#allocation3], 128
    $region37: #{tpu_custom_call.1} parent=1 // pred_fallthru
      _
    %145 = vsyncpa [#allocation3], 1

</llo_original>
